<compile_context>
chip_gen: v7x
topology: tpu7x:2x2x1
jax: 0.10.0
libtpu: 0.0.40
codegen_flags: <defaults>
</compile_context>

<pallas_src>
import functools

import jax
import jax.numpy as jnp
from jax.experimental import pallas as pl
from jax.experimental.pallas import tpu as pltpu


def _round_up(v, m):
    return ((v + m - 1) // m) * m


def _netvlad_kernel(x_ref, w_ref, b_ref, c_ref, o_ref, agg_acc, mass_acc, *,
                    normalize_input, eps, seq_len):
    """Grid point (n, t): one (tile_t, D) time-slab of one batch element.

    x_ref:    (tile_t, D)   input slab (leading batch dim squeezed)
    w_ref:    (D, Kp)       1x1-conv weight (= 0.2 * centroids^T), K lane-padded
    b_ref:    (1, Kp)       conv bias (= -0.1 * ||c||), padded columns = -1e30
    c_ref:    (K, D)        centroids (f32)
    o_ref:    (K, D)        normalized VLAD for this batch element
    agg_acc:  (Kp, D) f32   scratch accumulator: sum_t a[t, k] * x[t, d]
    mass_acc: (Kp, 1) f32   scratch accumulator: sum_t a[t, k]
    """
    t_idx = pl.program_id(1)
    tile_t = x_ref.shape[0]
    k = o_ref.shape[0]

    @pl.when(t_idx == 0)
    def _init():
        agg_acc[...] = jnp.zeros_like(agg_acc)
        mass_acc[...] = jnp.zeros_like(mass_acc)

    x_in = x_ref[...]                                      # (tile_t, D), input dtype
    if normalize_input:
        x_f32 = x_in.astype(jnp.float32)
        inv = jax.lax.rsqrt(
            jnp.maximum(jnp.sum(x_f32 * x_f32, axis=-1, keepdims=True), eps * eps))
        x_mm = (x_f32 * inv).astype(x_in.dtype)
    else:
        x_mm = x_in

    # 1x1 Conv1d over the feature axis == matmul + bias -> soft-assignment logits
    logits = jax.lax.dot_general(
        x_mm, w_ref[...], (((1,), (0,)), ((), ())),
        preferred_element_type=jnp.float32) + b_ref[...]            # (tile_t, Kp)

    # softmax over the (lane-padded) cluster axis; padded columns give exactly 0
    m = jnp.max(logits, axis=-1, keepdims=True)
    e = jnp.exp(logits - m)
    a = e / jnp.sum(e, axis=-1, keepdims=True)                      # (tile_t, Kp) f32

    if seq_len is not None:  # zero the assignments of zero-padded time rows
        row = t_idx * tile_t + jax.lax.broadcasted_iota(jnp.int32, (tile_t, 1), 0)
        a = jnp.where(row < seq_len, a, 0.0)

    # agg[k, d] += sum_t a[t, k] * x[t, d]   (MXU, contraction on axis 0 of both
    # operands -> no explicit transpose of `a`)
    agg_acc[...] += jax.lax.dot_general(
        a.astype(x_mm.dtype), x_mm, (((0,), (0,)), ((), ())),
        preferred_element_type=jnp.float32)
    mass_acc[...] += jnp.sum(a, axis=0)[:, None]                    # (Kp, 1)

    @pl.when(t_idx == pl.num_programs(1) - 1)
    def _finalize():
        vlad = agg_acc[...][:k] - mass_acc[...][:k] * c_ref[...]    # (K, D) f32
        # intra-normalization over the feature axis (F.normalize, p=2, dim=2)
        inv_row = jax.lax.rsqrt(
            jnp.maximum(jnp.sum(vlad * vlad, axis=-1, keepdims=True), eps * eps))
        vlad = vlad * inv_row
        # global L2 normalization of the flattened (K*D) descriptor
        inv_g = jax.lax.rsqrt(jnp.maximum(jnp.sum(vlad * vlad), eps * eps))
        o_ref[...] = (vlad * inv_g).astype(o_ref.dtype)


def netvlad_consensus(x, centroids, *, normalize_input=False, eps=1e-12, tile_t=512):
    """x: (N, T, D); centroids: (K, D) float32  ->  (N, K*D)."""
    N, T, D = x.shape
    K = centroids.shape[0]
    centroids = centroids.astype(jnp.float32)

    # --- time tiling (reduction grid axis) -----------------------------------
    tile_t = max(8, min(int(tile_t), _round_up(T, 8)))
    tile_t = _round_up(tile_t, 8)
    t_pad = _round_up(T, tile_t)
    if t_pad != T:
        x = jnp.pad(x, ((0, 0), (0, t_pad - T), (0, 0)))
    num_t_tiles = t_pad // tile_t

    # --- parameters (mirrors _init_params: weight = 2*0.1*c, bias = -0.1*||c||),
    #     cluster axis padded to a 128-lane multiple (zero w, -1e30 bias) ------
    # NOTE: the module's `alpha` arg is unused by _init_params (0.1 hard-coded).
    kp = _round_up(K, 128)
    w = (0.2 * centroids).T.astype(x.dtype)                                   # (D, K)
    b = (-0.1 * jnp.sqrt(jnp.sum(centroids * centroids, axis=1)))[None, :]    # (1, K) f32
    if kp != K:
        w = jnp.pad(w, ((0, 0), (0, kp - K)))
        b = jnp.pad(b, ((0, 0), (0, kp - K)), constant_values=-1e30)

    kernel = functools.partial(
        _netvlad_kernel,
        normalize_input=normalize_input,
        eps=float(eps),
        seq_len=(T if t_pad != T else None),
    )

    out = pl.pallas_call(
        kernel,
        out_shape=jax.ShapeDtypeStruct((N, K, D), x.dtype),
        grid_spec=pltpu.PrefetchScalarGridSpec(
            num_scalar_prefetch=0,
            grid=(N, num_t_tiles),
            in_specs=[
                pl.BlockSpec((pl.Squeezed(), tile_t, D), lambda n, t: (n, t, 0)),
                pl.BlockSpec((D, kp), lambda n, t: (0, 0)),
                pl.BlockSpec((1, kp), lambda n, t: (0, 0)),
                pl.BlockSpec((K, D), lambda n, t: (0, 0)),
            ],
            out_specs=pl.BlockSpec((pl.Squeezed(), K, D), lambda n, t: (n, 0, 0)),
            scratch_shapes=[
                pltpu.VMEM((kp, D), jnp.float32),   # aggregate  sum_t a*x
                pltpu.VMEM((kp, 1), jnp.float32),   # assignment mass sum_t a
            ],
        ),
        compiler_params=pltpu.CompilerParams(
            dimension_semantics=("parallel", "arbitrary"),
            vmem_limit_bytes=32 * 1024 * 1024,
        ),
    )(x, w, b, centroids)

    return out.reshape(N, K * D)


def _reference(x, centroids, normalize_input=False, eps=1e-12):
    """Pure-JAX transcription of the PyTorch forward (for correctness check)."""
    N, T, D = x.shape
    K = centroids.shape[0]
    xt = jnp.transpose(x, (0, 2, 1))                        # (N, D, T) — NCW as in torch
    if normalize_input:
        xt = xt / jnp.maximum(jnp.linalg.norm(xt, axis=1, keepdims=True), eps)
    w = 0.2 * centroids                                     # (K, D)
    b = -0.1 * jnp.linalg.norm(centroids, axis=1)           # (K,)
    conv = jnp.einsum("kd,ndt->nkt", w, xt) + b[None, :, None]
    a = jax.nn.softmax(conv, axis=1)                        # (N, K, T)
    residual = xt[:, None, :, :] - centroids[None, :, :, None]   # (N, K, D, T)
    residual = residual * a[:, :, None, :]
    vlad = residual.sum(-1)                                 # (N, K, D)
    vlad = vlad / jnp.maximum(jnp.linalg.norm(vlad, axis=2, keepdims=True), eps)
    vlad = vlad.reshape(N, K * D)
    vlad = vlad / jnp.maximum(jnp.linalg.norm(vlad, axis=1, keepdims=True), eps)
    return vlad


if __name__ == "__main__":
    # Small deterministic example: batch=2, seq=16, feature_size=32, clusters=8
    N, T, D, K = 2, 16, 32, 8
    key = jax.random.PRNGKey(0)
    k_x, k_c, k_x2 = jax.random.split(key, 3)
    x = jax.random.normal(k_x, (N, T, D), dtype=jnp.float32)
    centroids = jax.random.uniform(k_c, (K, D), dtype=jnp.float32)  # torch.rand equivalent

    # tile_t=8 -> 2 time-tiles per batch element: exercises the accumulator path.
    out = jax.block_until_ready(netvlad_consensus(x, centroids, tile_t=8))
    ref = _reference(x, centroids)
    assert out.shape == (N, K * D)
    assert jnp.allclose(out, ref, rtol=1e-4, atol=1e-4), "mismatch vs reference"

    # Ragged T (in-kernel padded-row masking) + input normalization.
    T2 = 12
    x2 = jax.random.normal(k_x2, (N, T2, D), dtype=jnp.float32)
    out2 = jax.block_until_ready(
        netvlad_consensus(x2, centroids, normalize_input=True, tile_t=8))
    ref2 = _reference(x2, centroids, normalize_input=True)
    assert out2.shape == (N, K * D)
    assert jnp.allclose(out2, ref2, rtol=1e-4, atol=1e-4), "mismatch vs reference (masked)"

    print("KERNEL_OK")
</pallas_src>

<mosaic_0001>
module attributes {stable_mosaic.version = 11 : i64} {
  func.func @_netvlad_kernel(%arg0: i32, %arg1: i32, %arg2: memref<1x8x32xf32, #tpu.memory_space<vmem>>, %arg3: memref<32x128xf32, #tpu.memory_space<vmem>>, %arg4: memref<1x128xf32, #tpu.memory_space<vmem>>, %arg5: memref<8x32xf32, #tpu.memory_space<vmem>>, %arg6: memref<1x8x32xf32, #tpu.memory_space<vmem>>, %arg7: memref<128x32xf32, #tpu.memory_space<vmem>>, %arg8: memref<128x1xf32, #tpu.memory_space<vmem>>) attributes {dimension_semantics = [#tpu.dimension_semantics<parallel>, #tpu.dimension_semantics<arbitrary>], iteration_bounds = array<i64: 2, 2>, scalar_prefetch = 0 : i64, scratch_operands = 2 : i64, tpu.core_type = #tpu.core_type<tc>, window_params = [{transform_indices = @transform_0, window_bounds = array<i64: 1, 8, 32>}, {pipeline_mode = #tpu.pipeline_mode<synchronous>, transform_indices = @transform_1, window_bounds = array<i64: 32, 128>}, {pipeline_mode = #tpu.pipeline_mode<synchronous>, transform_indices = @transform_2, window_bounds = array<i64: 1, 128>}, {pipeline_mode = #tpu.pipeline_mode<synchronous>, transform_indices = @transform_3, window_bounds = array<i64: 8, 32>}, {transform_indices = @transform_4, window_bounds = array<i64: 1, 8, 32>}]} {
    %c0_i32 = arith.constant 0 : i32
    %0 = arith.cmpi eq, %arg1, %c0_i32 : i32
    %1 = arith.extui %0 : i1 to i32
    %c0_i32_0 = arith.constant 0 : i32
    %2 = arith.cmpi ne, %1, %c0_i32_0 : i32
    scf.if %2 {
      %cst_20 = arith.constant 0.000000e+00 : f32
      %31 = vector.broadcast %cst_20 : f32 to vector<128x32xf32>
      %c0_21 = arith.constant 0 : index
      %c0_22 = arith.constant 0 : index
      %32 = vector.load %arg7[%c0_21, %c0_22] : memref<128x32xf32, #tpu.memory_space<vmem>>, vector<128x32xf32>
      tpu.vector_store %arg7[%c0_21, %c0_22], %31 {strides = array<i32>} : memref<128x32xf32, #tpu.memory_space<vmem>>, vector<128x32xf32>,
      %cst_23 = arith.constant 0.000000e+00 : f32
      %33 = vector.broadcast %cst_23 : f32 to vector<128x1xf32>
      %c0_24 = arith.constant 0 : index
      %c0_25 = arith.constant 0 : index
      %34 = vector.load %arg8[%c0_24, %c0_25] : memref<128x1xf32, #tpu.memory_space<vmem>>, vector<128x1xf32>
      tpu.vector_store %arg8[%c0_24, %c0_25], %33 {strides = array<i32>} : memref<128x1xf32, #tpu.memory_space<vmem>>, vector<128x1xf32>,
    } else {
    }
    %c0 = arith.constant 0 : index
    %c0_1 = arith.constant 0 : index
    %c0_2 = arith.constant 0 : index
    %3 = vector.load %arg2[%c0, %c0_1, %c0_2] : memref<1x8x32xf32, #tpu.memory_space<vmem>>, vector<1x8x32xf32>
    %4 = vector.shape_cast %3 : vector<1x8x32xf32> to vector<8x32xf32>
    %c0_3 = arith.constant 0 : index
    %c0_4 = arith.constant 0 : index
    %5 = vector.load %arg3[%c0_3, %c0_4] : memref<32x128xf32, #tpu.memory_space<vmem>>, vector<32x128xf32>
    %cst = arith.constant dense<0.000000e+00> : vector<8x128xf32>
    %6 = tpu.matmul %4, %5, %cst {dimension_numbers = #tpu.dot_dimension_numbers<[1], [0], [0], [1], [0, 0, 1, 1], [], []>} : vector<8x32xf32>, vector<32x128xf32>, vector<8x128xf32> -> vector<8x128xf32>
    %c0_5 = arith.constant 0 : index
    %c0_6 = arith.constant 0 : index
    %7 = vector.load %arg4[%c0_5, %c0_6] : memref<1x128xf32, #tpu.memory_space<vmem>>, vector<1x128xf32>
    %8 = vector.broadcast %7 : vector<1x128xf32> to vector<8x128xf32>
    %9 = arith.addf %6, %8 : vector<8x128xf32>
    %cst_7 = arith.constant dense<0xFF800000> : vector<8xf32>
    %10 = vector.multi_reduction <maximumf>, %9, %cst_7 [1] : vector<8x128xf32> to vector<8xf32>
    %11 = vector.shape_cast %10 : vector<8xf32> to vector<8x1xf32>
    %12 = vector.broadcast %11 : vector<8x1xf32> to vector<8x128xf32>
    %13 = arith.subf %9, %12 : vector<8x128xf32>
    %14 = math.exp %13 : vector<8x128xf32>
    %cst_8 = arith.constant dense<0.000000e+00> : vector<8xf32>
    %15 = vector.multi_reduction <add>, %14, %cst_8 [1] : vector<8x128xf32> to vector<8xf32>
    %16 = vector.shape_cast %15 : vector<8xf32> to vector<8x1xf32>
    %17 = vector.broadcast %16 : vector<8x1xf32> to vector<8x128xf32>
    %18 = arith.divf %14, %17 : vector<8x128xf32>
    %c0_9 = arith.constant 0 : index
    %c0_10 = arith.constant 0 : index
    %19 = vector.load %arg7[%c0_9, %c0_10] : memref<128x32xf32, #tpu.memory_space<vmem>>, vector<128x32xf32>
    %cst_11 = arith.constant dense<0.000000e+00> : vector<128x32xf32>
    %20 = tpu.matmul %18, %4, %cst_11 {dimension_numbers = #tpu.dot_dimension_numbers<[0], [0], [1], [1], [0, 1, 1, 1], [], []>} : vector<8x128xf32>, vector<8x32xf32>, vector<128x32xf32> -> vector<128x32xf32>
    %21 = arith.addf %19, %20 : vector<128x32xf32>
    %c0_12 = arith.constant 0 : index
    %c0_13 = arith.constant 0 : index
    %22 = vector.load %arg7[%c0_12, %c0_13] : memref<128x32xf32, #tpu.memory_space<vmem>>, vector<128x32xf32>
    tpu.vector_store %arg7[%c0_12, %c0_13], %21 {strides = array<i32>} : memref<128x32xf32, #tpu.memory_space<vmem>>, vector<128x32xf32>,
    %c0_14 = arith.constant 0 : index
    %c0_15 = arith.constant 0 : index
    %23 = vector.load %arg8[%c0_14, %c0_15] : memref<128x1xf32, #tpu.memory_space<vmem>>, vector<128x1xf32>
    %cst_16 = arith.constant dense<0.000000e+00> : vector<128xf32>
    %24 = vector.multi_reduction <add>, %18, %cst_16 [0] : vector<8x128xf32> to vector<128xf32>
    %25 = vector.shape_cast %24 : vector<128xf32> to vector<128x1xf32>
    %26 = arith.addf %23, %25 : vector<128x1xf32>
    %c0_17 = arith.constant 0 : index
    %c0_18 = arith.constant 0 : index
    %27 = vector.load %arg8[%c0_17, %c0_18] : memref<128x1xf32, #tpu.memory_space<vmem>>, vector<128x1xf32>
    tpu.vector_store %arg8[%c0_17, %c0_18], %26 {strides = array<i32>} : memref<128x1xf32, #tpu.memory_space<vmem>>, vector<128x1xf32>,
    %c1_i32 = arith.constant 1 : i32
    %28 = arith.cmpi eq, %arg1, %c1_i32 : i32
    %29 = arith.extui %28 : i1 to i32
    %c0_i32_19 = arith.constant 0 : i32
    %30 = arith.cmpi ne, %29, %c0_i32_19 : i32
    scf.if %30 {
      %c0_20 = arith.constant 0 : index
      %c0_21 = arith.constant 0 : index
      %31 = vector.load %arg7[%c0_20, %c0_21] : memref<128x32xf32, #tpu.memory_space<vmem>>, vector<128x32xf32>
      %32 = vector.extract_strided_slice %31 {offsets = [0, 0], sizes = [8, 32], strides = [1, 1]} : vector<128x32xf32> to vector<8x32xf32>
      %c0_22 = arith.constant 0 : index
      %c0_23 = arith.constant 0 : index
      %33 = vector.load %arg8[%c0_22, %c0_23] : memref<128x1xf32, #tpu.memory_space<vmem>>, vector<128x1xf32>
      %34 = vector.extract_strided_slice %33 {offsets = [0, 0], sizes = [8, 1], strides = [1, 1]} : vector<128x1xf32> to vector<8x1xf32>
      %c0_24 = arith.constant 0 : index
      %c0_25 = arith.constant 0 : index
      %35 = vector.load %arg5[%c0_24, %c0_25] : memref<8x32xf32, #tpu.memory_space<vmem>>, vector<8x32xf32>
      %36 = vector.broadcast %34 : vector<8x1xf32> to vector<8x32xf32>
      %37 = arith.mulf %36, %35 : vector<8x32xf32>
      %38 = arith.subf %32, %37 : vector<8x32xf32>
      %39 = arith.mulf %38, %38 : vector<8x32xf32>
      %cst_26 = arith.constant dense<0.000000e+00> : vector<8xf32>
      %40 = vector.multi_reduction <add>, %39, %cst_26 [1] : vector<8x32xf32> to vector<8xf32>
      %41 = vector.shape_cast %40 : vector<8xf32> to vector<8x1xf32>
      %cst_27 = arith.constant 1.000000e-24 : f32
      %42 = vector.broadcast %cst_27 : f32 to vector<8x1xf32>
      %43 = arith.maximumf %41, %42 : vector<8x1xf32>
      %44 = math.rsqrt %43 : vector<8x1xf32>
      %45 = vector.broadcast %44 : vector<8x1xf32> to vector<8x32xf32>
      %46 = arith.mulf %38, %45 : vector<8x32xf32>
      %47 = arith.mulf %46, %46 : vector<8x32xf32>
      %48 = vector.shape_cast %47 : vector<8x32xf32> to vector<1x8x32xf32>
      %cst_28 = arith.constant dense<0.000000e+00> : vector<1xf32>
      %49 = vector.multi_reduction <add>, %48, %cst_28 [1, 2] : vector<1x8x32xf32> to vector<1xf32>
      %50 = vector.shape_cast %49 : vector<1xf32> to vector<1x1x1xf32>
      %51 = vector.extract %50[0, 0, 0] : f32 from vector<1x1x1xf32>
      %cst_29 = arith.constant 1.000000e-24 : f32
      %52 = arith.maximumf %51, %cst_29 : f32
      %53 = math.rsqrt %52 : f32
      %54 = vector.broadcast %53 : f32 to vector<8x32xf32>
      %55 = arith.mulf %46, %54 : vector<8x32xf32>
      %c0_30 = arith.constant 0 : index
      %c0_31 = arith.constant 0 : index
      %c0_32 = arith.constant 0 : index
      %56 = vector.load %arg6[%c0_30, %c0_31, %c0_32] : memref<1x8x32xf32, #tpu.memory_space<vmem>>, vector<1x8x32xf32>
      %57 = vector.shape_cast %56 : vector<1x8x32xf32> to vector<8x32xf32>
      %58 = vector.shape_cast %55 : vector<8x32xf32> to vector<1x8x32xf32>
      tpu.vector_store %arg6[%c0_30, %c0_31, %c0_32], %58 {strides = array<i32>} : memref<1x8x32xf32, #tpu.memory_space<vmem>>, vector<1x8x32xf32>,
    } else {
    }
    return
  }
  func.func @transform_0(%arg0: i32, %arg1: i32) -> (i32, i32, i32) {
    %c0_i32 = arith.constant 0 : i32
    %c0_i32_0 = arith.constant 0 : i32
    return %arg0, %arg1, %c0_i32 : i32, i32, i32
  }
  func.func @transform_1(%arg0: i32, %arg1: i32) -> (i32, i32) {
    %c0_i32 = arith.constant 0 : i32
    %c0_i32_0 = arith.constant 0 : i32
    %c0_i32_1 = arith.constant 0 : i32
    return %c0_i32, %c0_i32_0 : i32, i32
  }
  func.func @transform_2(%arg0: i32, %arg1: i32) -> (i32, i32) {
    %c0_i32 = arith.constant 0 : i32
    %c0_i32_0 = arith.constant 0 : i32
    %c0_i32_1 = arith.constant 0 : i32
    return %c0_i32, %c0_i32_0 : i32, i32
  }
  func.func @transform_3(%arg0: i32, %arg1: i32) -> (i32, i32) {
    %c0_i32 = arith.constant 0 : i32
    %c0_i32_0 = arith.constant 0 : i32
    %c0_i32_1 = arith.constant 0 : i32
    return %c0_i32, %c0_i32_0 : i32, i32
  }
  func.func @transform_4(%arg0: i32, %arg1: i32) -> (i32, i32, i32) {
    %c0_i32 = arith.constant 0 : i32
    %c0_i32_0 = arith.constant 0 : i32
    %c0_i32_1 = arith.constant 0 : i32
    return %arg0, %c0_i32, %c0_i32_0 : i32, i32, i32
  }
}

</mosaic_0001>

<llo_original>
// kernel: tpu_custom_call.1
$region0: #{tpu_custom_call.1}
  #allocation0 [shape = 'u32[]', space=smem, size = 0x4, offset = 0x4, fixed_abs, tag = 'smem constant byte address 0x4 - core index']
  #allocation1 [shape = 'u32[144,128]{1,0:T(1,128)}', space=vmem, size = 0x12000, scoped, tag = 'internal scratch']
  #allocation2 [shape = 'f32[128,32]{1,0:T(8,128)}', space=vmem, size = 0x10000, scoped, tag = 'scratch operand']
  #allocation3 [shape = 'f32[128,1]{1,0:T(8,128)}', space=vmem, size = 0x10000, scoped, tag = 'scratch operand']
  %s0 = inlined_call_operand.hbm [shape: f32[2,16,32], index: 0, kind: input, shape index: {}]
  %s1 = inlined_call_operand.hbm [shape: f32[32,128], index: 1, kind: input, shape index: {}]
  %s2 = inlined_call_operand.vmem [shape: f32[1,128], index: 2, kind: input, shape index: {}]
  %s3 = inlined_call_operand.vmem [shape: f32[8,32], index: 3, kind: input, shape index: {}]
  %s4 = inlined_call_operand.hbm [shape: f32[2,8,32], index: 4, kind: output, shape index: {}]
  %s5 = sld [smem:[#allocation0]]
  $region65: #{tpu_custom_call.1} parent=0
    _
  %s7 = ssub.s32 1, %s5
  %s8 = scalar_select 0, %s7, %s5
  $region1: #{tpu_custom_call.1} parent=0
    #allocation4 [shape = 'u8[8192]{0}', space=vmem, size = 0x2000, scoped, tag = 'input window, operand 0']
    #allocation5 [shape = 's32[2]{0}', space=sflag, size = 0x8, scoped, tag = 'scoped memory for tpu_custom_call.1']
    #allocation6 [shape = 's32[2]{0}', space=sflag, size = 0x8, scoped, tag = 'scoped memory for tpu_custom_call.1']
    #allocation7 [shape = 'u8[16384]{0}', space=vmem, size = 0x4000, scoped, tag = 'input window, operand 1, single buffered']
    #allocation8 [shape = 's32[1]{0}', space=sflag, size = 0x4, scoped, tag = 'scoped memory for tpu_custom_call.1']
    #allocation9 [shape = 'u8[8192]{0}', space=vmem, size = 0x2000, scoped, tag = 'output window, operand 0']
    %9 = vsyncpa [#allocation5], 0
    %s10 = scalar_lea.sflag [#allocation5], 1
    %11 = vsyncpa %s10, 0
    %12 = vsyncpa [#allocation8], 0
    %13 = vsyncpa [#allocation6], 0
    %s14 = scalar_lea.sflag [#allocation6], 1
    %15 = vsyncpa %s14, 0
    loop: start=0, step=1, limit=6
    $region2: #{tpu_custom_call.1} parent=1 // loop_pre_header
      _
    $region3: #{tpu_custom_call.1} parent=1 // loop_header
      %s17 = sphi 0, %s21
      %p18 = scmp.ge.s32.totalorder %s17, 6
      %s24 = sphi 0, %s36
      %s25 = sphi 0, %s32
      %s26 = sphi 0, %s24
      %s27 = sphi 0, %s25
      %s28 = sphi 0, %s26
      %s29 = sphi 0, %s27
      %s41 = sphi 0, %s43
      %s44 = sphi 0, %s41
      %s45 = sphi 0, %s44
      %s61 = sphi 0, %s45
      %s65 = sphi 0, %s65
      %s67 = sphi 0, %s65
      %s68 = sphi 0, %s67
      %s82 = sphi 0, %s68
      %s86 = sphi 0, %s86
      %s88 = sphi 0, %s86
      %s89 = sphi 0, %s88
      %s103 = sphi 0, %s89
      %s107 = sphi 0, %s107
      %s109 = sphi 0, %s107
      %s110 = sphi 0, %s109
      %s124 = sphi 0, %s110
      %s130 = sphi 0, %s132
      %s133 = sphi 0, %s130
      %s134 = sphi 0, %s133
      %s150 = sphi 0, %s134
    $region4: #{tpu_custom_call.1} parent=1 // loop_header_branch
      %20 = sbr.rel (%p18) target = $region8
    $region5: #{tpu_custom_call.1} parent=1 // loop_body
      %s22 = ssub.s32 %s17, 1
      %s23 = ssub.s32 %s17, 2
      %s30 = sadd.s32 1, %s25
      %p31 = scmp.ge.s32.totalorder %s30, 2
      %s32 = scalar_select %p31, 0, %s30
      %s33 = sadd.s32 1, %s24
      %s34 = scalar_select %p31, %s33, %s24
      %p35 = scmp.ge.s32.totalorder %s34, 2
      %s36 = scalar_select %p35, 0, %s34
      %s37 = ssub.s32 %s24, %s36
      %s38 = ssub.s32 %s25, %s32
      %s39 = sor.u32 %s37, %s38
      %p40 = scmp.eq.s32.totalorder %s39, 0
      %s42 = sadd.s32 %s41, 1
      %s43 = scalar_select %p40, %s41, %s42
      %p46 = pneg %p40
      %p47 = scmp.eq.s32.totalorder %s17, 3
      %p48 = por %p46, %p47
      %p49 = scmp.ne.s32.totalorder %s41, %s44
      %p50 = scmp.eq.s32.totalorder %s17, 0
      %p51 = por %p49, %p50
      %p52 = scmp.ne.s32.totalorder %s41, %s44
      %p53 = scmp.eq.s32.totalorder %s22, 3
      %p54 = por %p52, %p53
      %p55 = scmp.ne.s32.totalorder %s44, %s45
      %p56 = scmp.eq.s32.totalorder %s22, 0
      %p57 = por %p55, %p56
      %p58 = scmp.ne.s32.totalorder %s44, %s45
      %p59 = scmp.eq.s32.totalorder %s23, 3
      %p60 = por %p58, %p59
      %p62 = scmp.ne.s32.totalorder %s45, %s61
      %p63 = scmp.eq.s32.totalorder %s23, 0
      %p64 = por %p62, %p63
      %s66 = sadd.s32 %s65, 1
      %p69 = scmp.eq.s32.totalorder %s17, 3
      %p70 = scmp.ne.s32.totalorder %s65, %s67
      %p71 = scmp.eq.s32.totalorder %s17, 0
      %p72 = por %p70, %p71
      %p73 = scmp.ne.s32.totalorder %s65, %s67
      %p74 = scmp.eq.s32.totalorder %s22, 3
      %p75 = por %p73, %p74
      %p76 = scmp.ne.s32.totalorder %s67, %s68
      %p77 = scmp.eq.s32.totalorder %s22, 0
      %p78 = por %p76, %p77
      %p79 = scmp.ne.s32.totalorder %s67, %s68
      %p80 = scmp.eq.s32.totalorder %s23, 3
      %p81 = por %p79, %p80
      %p83 = scmp.ne.s32.totalorder %s68, %s82
      %p84 = scmp.eq.s32.totalorder %s23, 0
      %p85 = por %p83, %p84
      %s87 = sadd.s32 %s86, 1
      %p90 = scmp.eq.s32.totalorder %s17, 3
      %p91 = scmp.ne.s32.totalorder %s86, %s88
      %p92 = scmp.eq.s32.totalorder %s17, 0
      %p93 = por %p91, %p92
      %p94 = scmp.ne.s32.totalorder %s86, %s88
      %p95 = scmp.eq.s32.totalorder %s22, 3
      %p96 = por %p94, %p95
      %p97 = scmp.ne.s32.totalorder %s88, %s89
      %p98 = scmp.eq.s32.totalorder %s22, 0
      %p99 = por %p97, %p98
      %p100 = scmp.ne.s32.totalorder %s88, %s89
      %p101 = scmp.eq.s32.totalorder %s23, 3
      %p102 = por %p100, %p101
      %p104 = scmp.ne.s32.totalorder %s89, %s103
      %p105 = scmp.eq.s32.totalorder %s23, 0
      %p106 = por %p104, %p105
      %s108 = sadd.s32 %s107, 1
      %p111 = scmp.eq.s32.totalorder %s17, 3
      %p112 = scmp.ne.s32.totalorder %s107, %s109
      %p113 = scmp.eq.s32.totalorder %s17, 0
      %p114 = por %p112, %p113
      %p115 = scmp.ne.s32.totalorder %s107, %s109
      %p116 = scmp.eq.s32.totalorder %s22, 3
      %p117 = por %p115, %p116
      %p118 = scmp.ne.s32.totalorder %s109, %s110
      %p119 = scmp.eq.s32.totalorder %s22, 0
      %p120 = por %p118, %p119
      %p121 = scmp.ne.s32.totalorder %s109, %s110
      %p122 = scmp.eq.s32.totalorder %s23, 3
      %p123 = por %p121, %p122
      %p125 = scmp.ne.s32.totalorder %s110, %s124
      %p126 = scmp.eq.s32.totalorder %s23, 0
      %p127 = por %p125, %p126
      %s128 = ssub.s32 %s24, %s36
      %p129 = scmp.eq.s32.totalorder %s128, 0
      %s131 = sadd.s32 %s130, 1
      %s132 = scalar_select %p129, %s130, %s131
      %p135 = pneg %p129
      %p136 = scmp.eq.s32.totalorder %s17, 3
      %p137 = por %p135, %p136
      %p138 = scmp.ne.s32.totalorder %s130, %s133
      %p139 = scmp.eq.s32.totalorder %s17, 0
      %p140 = por %p138, %p139
      %p141 = scmp.ne.s32.totalorder %s130, %s133
      %p142 = scmp.eq.s32.totalorder %s22, 3
      %p143 = por %p141, %p142
      %p144 = scmp.ne.s32.totalorder %s133, %s134
      %p145 = scmp.eq.s32.totalorder %s22, 0
      %p146 = por %p144, %p145
      %p147 = scmp.ne.s32.totalorder %s133, %s134
      %p148 = scmp.eq.s32.totalorder %s23, 3
      %p149 = por %p147, %p148
      %p151 = scmp.ne.s32.totalorder %s134, %s150
      %p152 = scmp.eq.s32.totalorder %s23, 0
      %p153 = por %p151, %p152
      %p154 = scmp.le.s32.totalorder 1, %s17
      %p155 = scmp.lt.s32.totalorder %s17, 5
      %p156 = pnand %p154, %p155
      %p157 = pneg %p156
      // Predicated region
      $region9: #{tpu_custom_call.1} parent=5 // pred_check
        _
      $region10: #{tpu_custom_call.1} parent=5 // pred_check_branch
        %159 = sbr.rel (%p156) target = $region12
      $region11: #{tpu_custom_call.1} parent=5 // pred_region
        %s160 = ssub.s32 %s17, 1
        // Predicated region
        $region13: #{tpu_custom_call.1} parent=11 // pred_check
          %p161 = pneg %p78
        $region14: #{tpu_custom_call.1} parent=11 // pred_check_branch
          %163 = sbr.rel (%p161) target = $region16
        $region15: #{tpu_custom_call.1} parent=11 // pred_region
          %s165 = ssub.s32 512, 512
          %166 = vsyncadd [#allocation8], %s165
          %s167 = sshll.u32 [#allocation7], 4
          %s168 = int_to_ptr.vmem [resolvable:$true] %s167
          %173 = dma.hbm_to_vmem [thread:$0]  %s1, 512, %s168, [#allocation8], 128, 128, 8
        $region16: #{tpu_custom_call.1} parent=11 // pred_fallthru
          _
        // Predicated region
        $region17: #{tpu_custom_call.1} parent=11 // pred_check
          %p174 = pneg %p99
        $region18: #{tpu_custom_call.1} parent=11 // pred_check_branch
          %176 = sbr.rel (%p174) target = $region20
        $region19: #{tpu_custom_call.1} parent=11 // pred_region
          _
        $region20: #{tpu_custom_call.1} parent=11 // pred_fallthru
          _
        // Predicated region
        $region21: #{tpu_custom_call.1} parent=11 // pred_check
          %p177 = pneg %p120
        $region22: #{tpu_custom_call.1} parent=11 // pred_check_branch
          %179 = sbr.rel (%p177) target = $region24
        $region23: #{tpu_custom_call.1} parent=11 // pred_region
          _
        $region24: #{tpu_custom_call.1} parent=11 // pred_fallthru
          _
      $region12: #{tpu_custom_call.1} parent=5 // pred_fallthru
        _
      %p180 = scmp.lt.s32.totalorder %s17, 4
      // Predicated region
      $region25: #{tpu_custom_call.1} parent=5 // pred_check
        %p181 = pneg %p180
      $region26: #{tpu_custom_call.1} parent=5 // pred_check_branch
        %183 = sbr.rel (%p181) target = $region28
      $region27: #{tpu_custom_call.1} parent=5 // pred_region
        // Predicated region
        $region29: #{tpu_custom_call.1} parent=27 // pred_check
          %p184 = pneg %p51
        $region30: #{tpu_custom_call.1} parent=27 // pred_check_branch
          %186 = sbr.rel (%p184) target = $region32
        $region31: #{tpu_custom_call.1} parent=27 // pred_region
          %s187 = sand.u32 %s41, 1
          %s188 = scalar_lea.sflag [#allocation5], %s187
          %s189 = sand.u32 %s41, 1
          %s190 = smul.addr %s189, 8
          %s191 = scalar_lea.vmem [#allocation4], %s190
          %s193 = ssub.s32 128, 128
          %194 = vsyncadd %s188, %s193
          %s195 = smul.addr %s24, 2
          %s196 = sadd.s32 %s25, %s195
          %s197 = smul.addr %s196, 128
          %s198 = scalar_lea.hbm %s0, %s197
          %s200 = sshll.u32 %s191, 4
          %s201 = int_to_ptr.vmem [resolvable:$true] %s200
          %203 = dma.hbm_to_vmem [thread:$0]  %s198, 128, %s201, %s188
        $region32: #{tpu_custom_call.1} parent=27 // pred_fallthru
          _
      $region28: #{tpu_custom_call.1} parent=5 // pred_fallthru
        _
      %p204 = scmp.le.s32.totalorder 1, %s17
      %p205 = scmp.lt.s32.totalorder %s17, 5
      %p206 = pnand %p204, %p205
      %p207 = pneg %p206
      // Predicated region
      $region33: #{tpu_custom_call.1} parent=5 // pred_check
        _
      $region34: #{tpu_custom_call.1} parent=5 // pred_check_branch
        %209 = sbr.rel (%p206) target = $region36
      $region35: #{tpu_custom_call.1} parent=5 // pred_region
        %s210 = ssub.s32 %s17, 1
        %s211 = sand.u32 %s44, 1
        %s212 = scalar_lea.sflag [#allocation5], %s211
        %s213 = sand.u32 %s44, 1
        %s214 = smul.addr %s213, 8
        %s215 = scalar_lea.vmem [#allocation4], %s214
        // Predicated region
        $region37: #{tpu_custom_call.1} parent=35 // pred_check
          %p216 = pneg %p57
        $region38: #{tpu_custom_call.1} parent=35 // pred_check_branch
          %218 = sbr.rel (%p216) target = $region40
        $region39: #{tpu_custom_call.1} parent=35 // pred_region
          %219 = dma.done %s212, 128
        $region40: #{tpu_custom_call.1} parent=35 // pred_fallthru
          _
        // Predicated region
        $region41: #{tpu_custom_call.1} parent=35 // pred_check
          %p220 = pneg %p78
        $region42: #{tpu_custom_call.1} parent=35 // pred_check_branch
          %222 = sbr.rel (%p220) target = $region44
        $region43: #{tpu_custom_call.1} parent=35 // pred_region
          %223 = dma.done [#allocation8], 512
        $region44: #{tpu_custom_call.1} parent=35 // pred_fallthru
          _
        %s224 = sand.u32 %s44, 1
        %s225 = scalar_lea.sflag [#allocation5], %s224
        %s226 = sand.u32 %s44, 1
        %s227 = smul.addr %s226, 8
        %s228 = scalar_lea.vmem [#allocation4], %s227
        %p229 = pneg %p57
        %p230 = pneg %p54
        %p231 = pneg %p78
        %p232 = pneg %p75
        %p233 = pneg %p99
        %p234 = pneg %p96
        %p235 = pneg %p120
        %p236 = pneg %p117
        %p237 = pneg %p146
        %p238 = pneg %p143
        %s239 = sand.u32 %s133, 1
        %s240 = scalar_lea.sflag [#allocation6], %s239
        %s241 = sand.u32 %s133, 1
        %s242 = smul.addr %s241, 8
        %s243 = scalar_lea.vmem [#allocation9], %s242
        %p244 = scmp.eq.s32.totalorder %s27, 0
        // Predicated region
        $region45: #{tpu_custom_call.1} parent=35 // pred_check
          %p245 = pneg %p244
        $region46: #{tpu_custom_call.1} parent=35 // pred_check_branch
          %247 = sbr.rel (%p245) target = $region48
        $region47: #{tpu_custom_call.1} parent=35 // pred_region
          %vm248 = vcmask 261120
          %249 = vst.msk [vmem:[#allocation2] sm:$0xff] %vm248, 0.0
          %250 = vst.msk [vmem:[#allocation2 + $0x8] sm:$0xff] %vm248, 0.0
          %251 = vst.msk [vmem:[#allocation2 + $0x10] sm:$0xff] %vm248, 0.0
          %252 = vst.msk [vmem:[#allocation2 + $0x18] sm:$0xff] %vm248, 0.0
          %253 = vst.msk [vmem:[#allocation2 + $0x20] sm:$0xff] %vm248, 0.0
          %254 = vst.msk [vmem:[#allocation2 + $0x28] sm:$0xff] %vm248, 0.0
          %255 = vst.msk [vmem:[#allocation2 + $0x30] sm:$0xff] %vm248, 0.0
          %256 = vst.msk [vmem:[#allocation2 + $0x38] sm:$0xff] %vm248, 0.0
          %257 = vst.msk [vmem:[#allocation2 + $0x40] sm:$0xff] %vm248, 0.0
          %258 = vst.msk [vmem:[#allocation2 + $0x48] sm:$0xff] %vm248, 0.0
          %259 = vst.msk [vmem:[#allocation2 + $0x50] sm:$0xff] %vm248, 0.0
          %260 = vst.msk [vmem:[#allocation2 + $0x58] sm:$0xff] %vm248, 0.0
          %261 = vst.msk [vmem:[#allocation2 + $0x60] sm:$0xff] %vm248, 0.0
          %262 = vst.msk [vmem:[#allocation2 + $0x68] sm:$0xff] %vm248, 0.0
          %263 = vst.msk [vmem:[#allocation2 + $0x70] sm:$0xff] %vm248, 0.0
          %264 = vst.msk [vmem:[#allocation2 + $0x78] sm:$0xff] %vm248, 0.0
          %vm265 = vcmask 7168
          %266 = vst.msk [vmem:[#allocation3] sm:$0xff] %vm265, 0.0
          %267 = vst.msk [vmem:[#allocation3 + $0x8] sm:$0xff] %vm265, 0.0
          %268 = vst.msk [vmem:[#allocation3 + $0x10] sm:$0xff] %vm265, 0.0
          %269 = vst.msk [vmem:[#allocation3 + $0x18] sm:$0xff] %vm265, 0.0
          %270 = vst.msk [vmem:[#allocation3 + $0x20] sm:$0xff] %vm265, 0.0
          %271 = vst.msk [vmem:[#allocation3 + $0x28] sm:$0xff] %vm265, 0.0
          %272 = vst.msk [vmem:[#allocation3 + $0x30] sm:$0xff] %vm265, 0.0
          %273 = vst.msk [vmem:[#allocation3 + $0x38] sm:$0xff] %vm265, 0.0
          %274 = vst.msk [vmem:[#allocation3 + $0x40] sm:$0xff] %vm265, 0.0
          %275 = vst.msk [vmem:[#allocation3 + $0x48] sm:$0xff] %vm265, 0.0
          %276 = vst.msk [vmem:[#allocation3 + $0x50] sm:$0xff] %vm265, 0.0
          %277 = vst.msk [vmem:[#allocation3 + $0x58] sm:$0xff] %vm265, 0.0
          %278 = vst.msk [vmem:[#allocation3 + $0x60] sm:$0xff] %vm265, 0.0
          %279 = vst.msk [vmem:[#allocation3 + $0x68] sm:$0xff] %vm265, 0.0
          %280 = vst.msk [vmem:[#allocation3 + $0x70] sm:$0xff] %vm265, 0.0
          %281 = vst.msk [vmem:[#allocation3 + $0x78] sm:$0xff] %vm265, 0.0
        $region48: #{tpu_custom_call.1} parent=35 // pred_fallthru
          _
        %v282 = vld [vmem:[%s215] sm:$0xff]
        %v283 = vld [vmem:[#allocation7] sm:$0xff]
        %v284 = vld [vmem:[#allocation7 + $0x8] sm:$0xff]
        %v285 = vld [vmem:[#allocation7 + $0x10] sm:$0xff]
        %v286 = vld [vmem:[#allocation7 + $0x18] sm:$0xff]
        %v287 = vld [vmem:[%s2] sm:$0x1]
        %v289 = vlaneseq
        %v290 = vshrl.u32 %v289, 7
        %v291 = vsub.s32 0, %v290
        %v292 = vrot.slane %v287, %v291
        %vm294 = vcmask 261120
        %v296 = vsel %vm294, %v282, 0
        %298 = vmatprep.subr.mxu0 0.0
        %299 = vmatpush1.msra.mxu0 %v283
        %300 = vmatprep.subr.mxu0 0.0
        %301 = vmatpush1.msra.mxu0 %v284
        %302 = vmatprep.subr.mxu0 0.0
        %303 = vmatpush1.msra.mxu0 %v285
        %304 = vmatprep.subr.mxu0 0.0
        %305 = vmatpush1.msra.mxu0 %v286
        %306 = vmatprep.subr.mxu0 0.0
        %307 = vmatpush1.msra.mxu0 0.0
        %308 = vmatprep.subr.mxu0 0.0
        %309 = vmatpush1.msra.mxu0 0.0
        %310 = vmatprep.subr.mxu0 0.0
        %311 = vmatpush1.msra.mxu0 0.0
        %312 = vmatprep.subr.mxu0 0.0
        %313 = vmatpush1.msra.mxu0 0.0
        %314 = vmatprep.subr.mxu0 0.0
        %315 = vmatpush1.msra.mxu0 0.0
        %316 = vmatprep.subr.mxu0 0.0
        %317 = vmatpush1.msra.mxu0 0.0
        %318 = vmatprep.subr.mxu0 0.0
        %319 = vmatpush1.msra.mxu0 0.0
        %320 = vmatprep.subr.mxu0 0.0
        %321 = vmatpush1.msra.mxu0 0.0
        %322 = vmatprep.subr.mxu0 0.0
        %323 = vmatpush1.msra.mxu0 0.0
        %324 = vmatprep.subr.mxu0 0.0
        %325 = vmatpush1.msra.mxu0 0.0
        %326 = vmatprep.subr.mxu0 0.0
        %327 = vmatpush1.msra.mxu0 0.0
        %328 = vmatprep.subr.mxu0 0.0
        %329 = vmatpush1.msra.mxu0 0.0
        %330 = vmatprep.subr.mxu0 0.0
        %331 = vmatpush1.msra.mxu0 0.0
        %332 = vmatprep.subr.mxu0 0.0
        %333 = vmatpush1.msra.mxu0 0.0
        %334 = vmatprep.subr.mxu0 0.0
        %335 = vmatpush1.msra.mxu0 0.0
        %336 = vmatprep.subr.mxu0 0.0
        %337 = vmatpush1.msra.mxu0 0.0
        %338 = vmatprep.subr.mxu0 0.0
        %339 = vmatpush1.msra.mxu0 0.0
        %340 = vmatprep.subr.mxu0 0.0
        %341 = vmatpush1.msra.mxu0 0.0
        %342 = vmatprep.subr.mxu0 0.0
        %343 = vmatpush1.msra.mxu0 0.0
        %344 = vmatprep.subr.mxu0 0.0
        %345 = vmatpush1.msra.mxu0 0.0
        %346 = vmatprep.subr.mxu0 0.0
        %347 = vmatpush1.msra.mxu0 0.0
        %348 = vmatprep.subr.mxu0 0.0
        %349 = vmatpush1.msra.mxu0 0.0
        %350 = vmatprep.subr.mxu0 0.0
        %351 = vmatpush1.msra.mxu0 0.0
        %352 = vmatprep.subr.mxu0 0.0
        %353 = vmatpush1.msra.mxu0 0.0
        %354 = vmatprep.subr.mxu0 0.0
        %355 = vmatpush1.msra.mxu0 0.0
        %356 = vmatprep.subr.mxu0 0.0
        %357 = vmatpush1.msra.mxu0 0.0
        %358 = vmatprep.subr.mxu0 0.0
        %359 = vmatpush1.msra.mxu0 0.0
        %360 = vmatprep.subr.mxu0 0.0
        %361 = vmatpush1.msra.mxu0 0.0
        %362 = vmatprep.mubr.f32.mxu0 0.0
        %363 = vmatmul.mubr.f32.gmra.mrb[0].mxu0 %v296
        %v364 = vpop.f32.mrb[0].mxu0
        %v365 = vadd.f32 %v292, %v364
        %v366 = vpop.f32.mrb[0].mxu0
        %367 = vdwg.mxu0
        %368 = vmax.xlane.f32.xlu0 %v365
        %v369 = vpop.xlane.xlu0 %368
        %v370 = vsub.f32 %v365, %v369
        %v371 = vmul.f32 %v370, 1.442695
        %v372 = vpow.pop %v371
        %373 = vadd.xlane.f32.xlu0 %v372
        %v374 = vpop.xlane.xlu0 %373
        %v375 = vrcp.pop %v374
        %v376 = vmul.f32 %v372, %v375
        %v377 = vld [vmem:[#allocation2] sm:$0xff]
        %v378 = vld [vmem:[#allocation2 + $0x8] sm:$0xff]
        %v379 = vld [vmem:[#allocation2 + $0x10] sm:$0xff]
        %v380 = vld [vmem:[#allocation2 + $0x18] sm:$0xff]
        %v381 = vld [vmem:[#allocation2 + $0x20] sm:$0xff]
        %v382 = vld [vmem:[#allocation2 + $0x28] sm:$0xff]
        %v383 = vld [vmem:[#allocation2 + $0x30] sm:$0xff]
        %v384 = vld [vmem:[#allocation2 + $0x38] sm:$0xff]
        %v385 = vld [vmem:[#allocation2 + $0x40] sm:$0xff]
        %v386 = vld [vmem:[#allocation2 + $0x48] sm:$0xff]
        %v387 = vld [vmem:[#allocation2 + $0x50] sm:$0xff]
        %v388 = vld [vmem:[#allocation2 + $0x58] sm:$0xff]
        %v389 = vld [vmem:[#allocation2 + $0x60] sm:$0xff]
        %v390 = vld [vmem:[#allocation2 + $0x68] sm:$0xff]
        %v391 = vld [vmem:[#allocation2 + $0x70] sm:$0xff]
        %v392 = vld [vmem:[#allocation2 + $0x78] sm:$0xff]
        %393 = vxpose.xlu0.b32.start [1/16] %v376, 128
        %394 = vxpose.xlu0.b32.cont [2/16] 0.0, 128
        %395 = vxpose.xlu0.b32.cont [3/16] 0.0, 128
        %396 = vxpose.xlu0.b32.cont [4/16] 0.0, 128
        %397 = vxpose.xlu0.b32.cont [5/16] 0.0, 128
        %398 = vxpose.xlu0.b32.cont [6/16] 0.0, 128
        %399 = vxpose.xlu0.b32.cont [7/16] 0.0, 128
        %400 = vxpose.xlu0.b32.cont [8/16] 0.0, 128
        %401 = vxpose.xlu0.b32.cont [9/16] 0.0, 128
        %402 = vxpose.xlu0.b32.cont [10/16] 0.0, 128
        %403 = vxpose.xlu0.b32.cont [11/16] 0.0, 128
        %404 = vxpose.xlu0.b32.cont [12/16] 0.0, 128
        %405 = vxpose.xlu0.b32.cont [13/16] 0.0, 128
        %406 = vxpose.xlu0.b32.cont [14/16] 0.0, 128
        %407 = vxpose.xlu0.b32.cont [15/16] 0.0, 128
        %408 = vxpose.xlu0.b32.end [16/16] 0.0, 128
        %v409 = vpop.trf.xlu0
        %v410 = vpop.trf.xlu0
        %v411 = vpop.trf.xlu0
        %v412 = vpop.trf.xlu0
        %v413 = vpop.trf.xlu0
        %v414 = vpop.trf.xlu0
        %v415 = vpop.trf.xlu0
        %v416 = vpop.trf.xlu0
        %v417 = vpop.trf.xlu0
        %v418 = vpop.trf.xlu0
        %v419 = vpop.trf.xlu0
        %v420 = vpop.trf.xlu0
        %v421 = vpop.trf.xlu0
        %v422 = vpop.trf.xlu0
        %v423 = vpop.trf.xlu0
        %v424 = vpop.trf.xlu0
        %vm425 = vcmask 64512
        %v427 = vsel %vm425, %v409, 0
        %v430 = vsel %vm425, %v410, 0
        %v433 = vsel %vm425, %v411, 0
        %v436 = vsel %vm425, %v412, 0
        %v439 = vsel %vm425, %v413, 0
        %v442 = vsel %vm425, %v414, 0
        %v445 = vsel %vm425, %v415, 0
        %v448 = vsel %vm425, %v416, 0
        %v451 = vsel %vm425, %v417, 0
        %v454 = vsel %vm425, %v418, 0
        %v457 = vsel %vm425, %v419, 0
        %v460 = vsel %vm425, %v420, 0
        %v463 = vsel %vm425, %v421, 0
        %v466 = vsel %vm425, %v422, 0
        %v469 = vsel %vm425, %v423, 0
        %v472 = vsel %vm425, %v424, 0
        %474 = vmatprep.subr.mxu0 0.0
        %475 = vmatpush1.msra.mxu0 %v282
        %476 = vmatprep.subr.mxu0 0.0
        %477 = vmatpush1.msra.mxu0 0.0
        %478 = vmatprep.subr.mxu0 0.0
        %479 = vmatpush1.msra.mxu0 0.0
        %480 = vmatprep.subr.mxu0 0.0
        %481 = vmatpush1.msra.mxu0 0.0
        %482 = vmatprep.subr.mxu0 0.0
        %483 = vmatpush1.msra.mxu0 0.0
        %484 = vmatprep.subr.mxu0 0.0
        %485 = vmatpush1.msra.mxu0 0.0
        %486 = vmatprep.subr.mxu0 0.0
        %487 = vmatpush1.msra.mxu0 0.0
        %488 = vmatprep.subr.mxu0 0.0
        %489 = vmatpush1.msra.mxu0 0.0
        %490 = vmatprep.subr.mxu0 0.0
        %491 = vmatpush1.msra.mxu0 0.0
        %492 = vmatprep.subr.mxu0 0.0
        %493 = vmatpush1.msra.mxu0 0.0
        %494 = vmatprep.subr.mxu0 0.0
        %495 = vmatpush1.msra.mxu0 0.0
        %496 = vmatprep.subr.mxu0 0.0
        %497 = vmatpush1.msra.mxu0 0.0
        %498 = vmatprep.subr.mxu0 0.0
        %499 = vmatpush1.msra.mxu0 0.0
        %500 = vmatprep.subr.mxu0 0.0
        %501 = vmatpush1.msra.mxu0 0.0
        %502 = vmatprep.subr.mxu0 0.0
        %503 = vmatpush1.msra.mxu0 0.0
        %504 = vmatprep.subr.mxu0 0.0
        %505 = vmatpush1.msra.mxu0 0.0
        %506 = vmatprep.subr.mxu0 0.0
        %507 = vmatpush1.msra.mxu0 0.0
        %508 = vmatprep.subr.mxu0 0.0
        %509 = vmatpush1.msra.mxu0 0.0
        %510 = vmatprep.subr.mxu0 0.0
        %511 = vmatpush1.msra.mxu0 0.0
        %512 = vmatprep.subr.mxu0 0.0
        %513 = vmatpush1.msra.mxu0 0.0
        %514 = vmatprep.subr.mxu0 0.0
        %515 = vmatpush1.msra.mxu0 0.0
        %516 = vmatprep.subr.mxu0 0.0
        %517 = vmatpush1.msra.mxu0 0.0
        %518 = vmatprep.subr.mxu0 0.0
        %519 = vmatpush1.msra.mxu0 0.0
        %520 = vmatprep.subr.mxu0 0.0
        %521 = vmatpush1.msra.mxu0 0.0
        %522 = vmatprep.subr.mxu0 0.0
        %523 = vmatpush1.msra.mxu0 0.0
        %524 = vmatprep.subr.mxu0 0.0
        %525 = vmatpush1.msra.mxu0 0.0
        %526 = vmatprep.subr.mxu0 0.0
        %527 = vmatpush1.msra.mxu0 0.0
        %528 = vmatprep.subr.mxu0 0.0
        %529 = vmatpush1.msra.mxu0 0.0
        %530 = vmatprep.subr.mxu0 0.0
        %531 = vmatpush1.msra.mxu0 0.0
        %532 = vmatprep.subr.mxu0 0.0
        %533 = vmatpush1.msra.mxu0 0.0
        %534 = vmatprep.subr.mxu0 0.0
        %535 = vmatpush1.msra.mxu0 0.0
        %536 = vmatprep.subr.mxu0 0.0
        %537 = vmatpush1.msra.mxu0 0.0
        %538 = vmatprep.mubr.f32.mxu0 0.0
        %539 = vmatmul.mubr.f32.gmra.mrb[0].mxu0 %v427
        %v540 = vpop.f32.mrb[0].mxu0
        %v541 = vadd.f32 0.0, %v540
        %v542 = vpop.f32.mrb[0].mxu0
        %543 = vmatprep.mubr.f32.mxu0 0.0
        %544 = vmatmul.mubr.f32.gmra.mrb[0].mxu0 %v430
        %v545 = vpop.f32.mrb[0].mxu0
        %v546 = vadd.f32 0.0, %v545
        %v547 = vpop.f32.mrb[0].mxu0
        %548 = vmatprep.mubr.f32.mxu0 0.0
        %549 = vmatmul.mubr.f32.gmra.mrb[0].mxu0 %v433
        %v550 = vpop.f32.mrb[0].mxu0
        %v551 = vadd.f32 0.0, %v550
        %v552 = vpop.f32.mrb[0].mxu0
        %553 = vmatprep.mubr.f32.mxu0 0.0
        %554 = vmatmul.mubr.f32.gmra.mrb[0].mxu0 %v436
        %v555 = vpop.f32.mrb[0].mxu0
        %v556 = vadd.f32 0.0, %v555
        %v557 = vpop.f32.mrb[0].mxu0
        %558 = vmatprep.mubr.f32.mxu0 0.0
        %559 = vmatmul.mubr.f32.gmra.mrb[0].mxu0 %v439
        %v560 = vpop.f32.mrb[0].mxu0
        %v561 = vadd.f32 0.0, %v560
        %v562 = vpop.f32.mrb[0].mxu0
        %563 = vmatprep.mubr.f32.mxu0 0.0
        %564 = vmatmul.mubr.f32.gmra.mrb[0].mxu0 %v442
        %v565 = vpop.f32.mrb[0].mxu0
        %v566 = vadd.f32 0.0, %v565
        %v567 = vpop.f32.mrb[0].mxu0
        %568 = vmatprep.mubr.f32.mxu0 0.0
        %569 = vmatmul.mubr.f32.gmra.mrb[0].mxu0 %v445
        %v570 = vpop.f32.mrb[0].mxu0
        %v571 = vadd.f32 0.0, %v570
        %v572 = vpop.f32.mrb[0].mxu0
        %573 = vmatprep.mubr.f32.mxu0 0.0
        %574 = vmatmul.mubr.f32.gmra.mrb[0].mxu0 %v448
        %v575 = vpop.f32.mrb[0].mxu0
        %v576 = vadd.f32 0.0, %v575
        %v577 = vpop.f32.mrb[0].mxu0
        %578 = vmatprep.mubr.f32.mxu0 0.0
        %579 = vmatmul.mubr.f32.gmra.mrb[0].mxu0 %v451
        %v580 = vpop.f32.mrb[0].mxu0
        %v581 = vadd.f32 0.0, %v580
        %v582 = vpop.f32.mrb[0].mxu0
        %583 = vmatprep.mubr.f32.mxu0 0.0
        %584 = vmatmul.mubr.f32.gmra.mrb[0].mxu0 %v454
        %v585 = vpop.f32.mrb[0].mxu0
        %v586 = vadd.f32 0.0, %v585
        %v587 = vpop.f32.mrb[0].mxu0
        %588 = vmatprep.mubr.f32.mxu0 0.0
        %589 = vmatmul.mubr.f32.gmra.mrb[0].mxu0 %v457
        %v590 = vpop.f32.mrb[0].mxu0
        %v591 = vadd.f32 0.0, %v590
        %v592 = vpop.f32.mrb[0].mxu0
        %593 = vmatprep.mubr.f32.mxu0 0.0
        %594 = vmatmul.mubr.f32.gmra.mrb[0].mxu0 %v460
        %v595 = vpop.f32.mrb[0].mxu0
        %v596 = vadd.f32 0.0, %v595
        %v597 = vpop.f32.mrb[0].mxu0
        %598 = vmatprep.mubr.f32.mxu0 0.0
        %599 = vmatmul.mubr.f32.gmra.mrb[0].mxu0 %v463
        %v600 = vpop.f32.mrb[0].mxu0
        %v601 = vadd.f32 0.0, %v600
        %v602 = vpop.f32.mrb[0].mxu0
        %603 = vmatprep.mubr.f32.mxu0 0.0
        %604 = vmatmul.mubr.f32.gmra.mrb[0].mxu0 %v466
        %v605 = vpop.f32.mrb[0].mxu0
        %v606 = vadd.f32 0.0, %v605
        %v607 = vpop.f32.mrb[0].mxu0
        %608 = vmatprep.mubr.f32.mxu0 0.0
        %609 = vmatmul.mubr.f32.gmra.mrb[0].mxu0 %v469
        %v610 = vpop.f32.mrb[0].mxu0
        %v611 = vadd.f32 0.0, %v610
        %v612 = vpop.f32.mrb[0].mxu0
        %613 = vmatprep.mubr.f32.mxu0 0.0
        %614 = vmatmul.mubr.f32.gmra.mrb[0].mxu0 %v472
        %v615 = vpop.f32.mrb[0].mxu0
        %v616 = vadd.f32 0.0, %v615
        %v617 = vpop.f32.mrb[0].mxu0
        %618 = vdwg.mxu0
        %v619 = vadd.f32 %v377, %v541
        %v620 = vadd.f32 %v378, %v546
        %v621 = vadd.f32 %v379, %v551
        %v622 = vadd.f32 %v380, %v556
        %v623 = vadd.f32 %v381, %v561
        %v624 = vadd.f32 %v382, %v566
        %v625 = vadd.f32 %v383, %v571
        %v626 = vadd.f32 %v384, %v576
        %v627 = vadd.f32 %v385, %v581
        %v628 = vadd.f32 %v386, %v586
        %v629 = vadd.f32 %v387, %v591
        %v630 = vadd.f32 %v388, %v596
        %v631 = vadd.f32 %v389, %v601
        %v632 = vadd.f32 %v390, %v606
        %v633 = vadd.f32 %v391, %v611
        %v634 = vadd.f32 %v392, %v616
        %635 = vst.msk [vmem:[#allocation2] sm:$0xff] %vm294, %v619
        %636 = vst.msk [vmem:[#allocation2 + $0x8] sm:$0xff] %vm294, %v620
        %637 = vst.msk [vmem:[#allocation2 + $0x10] sm:$0xff] %vm294, %v621
        %638 = vst.msk [vmem:[#allocation2 + $0x18] sm:$0xff] %vm294, %v622
        %639 = vst.msk [vmem:[#allocation2 + $0x20] sm:$0xff] %vm294, %v623
        %640 = vst.msk [vmem:[#allocation2 + $0x28] sm:$0xff] %vm294, %v624
        %641 = vst.msk [vmem:[#allocation2 + $0x30] sm:$0xff] %vm294, %v625
        %642 = vst.msk [vmem:[#allocation2 + $0x38] sm:$0xff] %vm294, %v626
        %643 = vst.msk [vmem:[#allocation2 + $0x40] sm:$0xff] %vm294, %v627
        %644 = vst.msk [vmem:[#allocation2 + $0x48] sm:$0xff] %vm294, %v628
        %645 = vst.msk [vmem:[#allocation2 + $0x50] sm:$0xff] %vm294, %v629
        %646 = vst.msk [vmem:[#allocation2 + $0x58] sm:$0xff] %vm294, %v630
        %647 = vst.msk [vmem:[#allocation2 + $0x60] sm:$0xff] %vm294, %v631
        %648 = vst.msk [vmem:[#allocation2 + $0x68] sm:$0xff] %vm294, %v632
        %649 = vst.msk [vmem:[#allocation2 + $0x70] sm:$0xff] %vm294, %v633
        %650 = vst.msk [vmem:[#allocation2 + $0x78] sm:$0xff] %vm294, %v634
        %v651 = vld [vmem:[#allocation3] sm:$0xff]
        %v652 = vld [vmem:[#allocation3 + $0x8] sm:$0xff]
        %v653 = vld [vmem:[#allocation3 + $0x10] sm:$0xff]
        %v654 = vld [vmem:[#allocation3 + $0x18] sm:$0xff]
        %v655 = vld [vmem:[#allocation3 + $0x20] sm:$0xff]
        %v656 = vld [vmem:[#allocation3 + $0x28] sm:$0xff]
        %v657 = vld [vmem:[#allocation3 + $0x30] sm:$0xff]
        %v658 = vld [vmem:[#allocation3 + $0x38] sm:$0xff]
        %v659 = vld [vmem:[#allocation3 + $0x40] sm:$0xff]
        %v660 = vld [vmem:[#allocation3 + $0x48] sm:$0xff]
        %v661 = vld [vmem:[#allocation3 + $0x50] sm:$0xff]
        %v662 = vld [vmem:[#allocation3 + $0x58] sm:$0xff]
        %v663 = vld [vmem:[#allocation3 + $0x60] sm:$0xff]
        %v664 = vld [vmem:[#allocation3 + $0x68] sm:$0xff]
        %v665 = vld [vmem:[#allocation3 + $0x70] sm:$0xff]
        %v666 = vld [vmem:[#allocation3 + $0x78] sm:$0xff]
        %v667 = vrot.slane %v376, 4
        %v668 = vadd.f32 %v376, %v667
        %v669 = vrot.slane %v668, 2
        %v670 = vadd.f32 %v668, %v669
        %v671 = vrot.slane %v670, 1
        %v672 = vadd.f32 %v670, %v671
        %674 = vbcast.lane.b32.xlu0 %v672, 256
        %v675 = vpop.permute.xlu0 %674
        %s677 = sor.u32 256, 8
        %678 = vbcast.lane.b32.xlu0 %v672, %s677
        %v679 = vpop.permute.xlu0 %678
        %s681 = sor.u32 256, 16
        %682 = vbcast.lane.b32.xlu0 %v672, %s681
        %v683 = vpop.permute.xlu0 %682
        %s685 = sor.u32 256, 24
        %686 = vbcast.lane.b32.xlu0 %v672, %s685
        %v687 = vpop.permute.xlu0 %686
        %s689 = sor.u32 256, 32
        %690 = vbcast.lane.b32.xlu0 %v672, %s689
        %v691 = vpop.permute.xlu0 %690
        %s693 = sor.u32 256, 40
        %694 = vbcast.lane.b32.xlu0 %v672, %s693
        %v695 = vpop.permute.xlu0 %694
        %s697 = sor.u32 256, 48
        %698 = vbcast.lane.b32.xlu0 %v672, %s697
        %v699 = vpop.permute.xlu0 %698
        %s701 = sor.u32 256, 56
        %702 = vbcast.lane.b32.xlu0 %v672, %s701
        %v703 = vpop.permute.xlu0 %702
        %s705 = sor.u32 256, 64
        %706 = vbcast.lane.b32.xlu0 %v672, %s705
        %v707 = vpop.permute.xlu0 %706
        %s709 = sor.u32 256, 72
        %710 = vbcast.lane.b32.xlu0 %v672, %s709
        %v711 = vpop.permute.xlu0 %710
        %s713 = sor.u32 256, 80
        %714 = vbcast.lane.b32.xlu0 %v672, %s713
        %v715 = vpop.permute.xlu0 %714
        %s717 = sor.u32 256, 88
        %718 = vbcast.lane.b32.xlu0 %v672, %s717
        %v719 = vpop.permute.xlu0 %718
        %s721 = sor.u32 256, 96
        %722 = vbcast.lane.b32.xlu0 %v672, %s721
        %v723 = vpop.permute.xlu0 %722
        %s725 = sor.u32 256, 104
        %726 = vbcast.lane.b32.xlu0 %v672, %s725
        %v727 = vpop.permute.xlu0 %726
        %s729 = sor.u32 256, 112
        %730 = vbcast.lane.b32.xlu0 %v672, %s729
        %v731 = vpop.permute.xlu0 %730
        %s733 = sor.u32 256, 120
        %734 = vbcast.lane.b32.xlu0 %v672, %s733
        %v735 = vpop.permute.xlu0 %734
        %v736 = vadd.f32 %v651, %v675
        %v737 = vadd.f32 %v652, %v679
        %v738 = vadd.f32 %v653, %v683
        %v739 = vadd.f32 %v654, %v687
        %v740 = vadd.f32 %v655, %v691
        %v741 = vadd.f32 %v656, %v695
        %v742 = vadd.f32 %v657, %v699
        %v743 = vadd.f32 %v658, %v703
        %v744 = vadd.f32 %v659, %v707
        %v745 = vadd.f32 %v660, %v711
        %v746 = vadd.f32 %v661, %v715
        %v747 = vadd.f32 %v662, %v719
        %v748 = vadd.f32 %v663, %v723
        %v749 = vadd.f32 %v664, %v727
        %v750 = vadd.f32 %v665, %v731
        %v751 = vadd.f32 %v666, %v735
        %vm752 = vcmask 7168
        %753 = vst.msk [vmem:[#allocation3] sm:$0xff] %vm752, %v736
        %754 = vst.msk [vmem:[#allocation3 + $0x8] sm:$0xff] %vm752, %v737
        %755 = vst.msk [vmem:[#allocation3 + $0x10] sm:$0xff] %vm752, %v738
        %756 = vst.msk [vmem:[#allocation3 + $0x18] sm:$0xff] %vm752, %v739
        %757 = vst.msk [vmem:[#allocation3 + $0x20] sm:$0xff] %vm752, %v740
        %758 = vst.msk [vmem:[#allocation3 + $0x28] sm:$0xff] %vm752, %v741
        %759 = vst.msk [vmem:[#allocation3 + $0x30] sm:$0xff] %vm752, %v742
        %760 = vst.msk [vmem:[#allocation3 + $0x38] sm:$0xff] %vm752, %v743
        %761 = vst.msk [vmem:[#allocation3 + $0x40] sm:$0xff] %vm752, %v744
        %762 = vst.msk [vmem:[#allocation3 + $0x48] sm:$0xff] %vm752, %v745
        %763 = vst.msk [vmem:[#allocation3 + $0x50] sm:$0xff] %vm752, %v746
        %764 = vst.msk [vmem:[#allocation3 + $0x58] sm:$0xff] %vm752, %v747
        %765 = vst.msk [vmem:[#allocation3 + $0x60] sm:$0xff] %vm752, %v748
        %766 = vst.msk [vmem:[#allocation3 + $0x68] sm:$0xff] %vm752, %v749
        %767 = vst.msk [vmem:[#allocation3 + $0x70] sm:$0xff] %vm752, %v750
        %768 = vst.msk [vmem:[#allocation3 + $0x78] sm:$0xff] %vm752, %v751
        %p769 = scmp.eq.s32.totalorder %s27, 1
        // Predicated region
        $region49: #{tpu_custom_call.1} parent=35 // pred_check
          %p770 = pneg %p769
        $region50: #{tpu_custom_call.1} parent=35 // pred_check_branch
          %772 = sbr.rel (%p770) target = $region52
        $region51: #{tpu_custom_call.1} parent=35 // pred_region
          %v773 = vld [vmem:[#allocation2] sm:$0xff]
          %v774 = vld [vmem:[#allocation3] sm:$0xff]
          %v775 = vld [vmem:[%s3] sm:$0xff]
          %777 = vset.pattern.permute.xlu0 0
          %778 = vperm.xlu0 %777, %v774
          %v779 = vpop.permute.xlu0 %778
          %v781 = vmul.f32 %v779, %v775
          %v782 = vsub.f32 %v773, %v781
          %v783 = vmul.f32 %v782, %v782
          %v784 = vsel %vm294, %v783, 0.0
          %785 = vadd.xlane.f32.xlu0 %v784
          %v786 = vpop.xlane.xlu0 %785
          %v787 = vmax.f32 %v786, 1e-24
          %v788 = vrsqrt.pop %v787
          %v789 = vmul.f32 %v782, %v788
          %v790 = vmul.f32 %v789, %v789
          %v791 = vsel %vm294, %v790, 0.0
          %792 = vadd.xlane.f32.xlu0 %v791
          %v793 = vpop.xlane.xlu0 %792
          %v794 = vrot.slane %v793, 4
          %v795 = vadd.f32 %v793, %v794
          %v796 = vrot.slane %v795, 2
          %v797 = vadd.f32 %v795, %v796
          %v798 = vrot.slane %v797, 1
          %v799 = vadd.f32 %v797, %v798
          %s800 = vtos %v799
          %s801 = smax.f32 %s800, 1e-24
          %v802 = vstv %s801
          %v803 = vrsqrt.pop %v802
          %s804 = vtos %v803
          %v805 = vstv %s804
          %v806 = vmul.f32 %v789, %v805
          %807 = vst.msk [vmem:[%s243] sm:$0xff] %vm294, %v806
        $region52: #{tpu_custom_call.1} parent=35 // pred_fallthru
          _
        %s808 = sand.u32 %s133, 1
        %s809 = scalar_lea.sflag [#allocation6], %s808
        %s810 = sand.u32 %s133, 1
        %s811 = smul.addr %s810, 8
        %s812 = scalar_lea.vmem [#allocation9], %s811
        // Predicated region
        $region53: #{tpu_custom_call.1} parent=35 // pred_check
          %p813 = pneg %p143
        $region54: #{tpu_custom_call.1} parent=35 // pred_check_branch
          %815 = sbr.rel (%p813) target = $region56
        $region55: #{tpu_custom_call.1} parent=35 // pred_region
          %s817 = ssub.s32 128, 128
          %818 = vsyncadd %s809, %s817
          %s819 = smul.addr %s26, 128
          %s820 = scalar_lea.hbm %s4, %s819
          %s822 = sshll.u32 %s812, 4
          %s823 = int_to_ptr.vmem [resolvable:$true] %s822
          %825 = dma.vmem_to_hbm [thread:$0]  %s823, 128, %s820, %s809
        $region56: #{tpu_custom_call.1} parent=35 // pred_fallthru
          _
      $region36: #{tpu_custom_call.1} parent=5 // pred_fallthru
        _
      %p826 = scmp.le.s32.totalorder 2, %s17
      // Predicated region
      $region57: #{tpu_custom_call.1} parent=5 // pred_check
        %p827 = pneg %p826
      $region58: #{tpu_custom_call.1} parent=5 // pred_check_branch
        %829 = sbr.rel (%p827) target = $region60
      $region59: #{tpu_custom_call.1} parent=5 // pred_region
        %s830 = ssub.s32 %s17, 2
        // Predicated region
        $region61: #{tpu_custom_call.1} parent=59 // pred_check
          %p831 = pneg %p149
        $region62: #{tpu_custom_call.1} parent=59 // pred_check_branch
          %833 = sbr.rel (%p831) target = $region64
        $region63: #{tpu_custom_call.1} parent=59 // pred_region
          %s834 = sand.u32 %s134, 1
          %s835 = scalar_lea.sflag [#allocation6], %s834
          %s836 = sand.u32 %s134, 1
          %s837 = smul.addr %s836, 8
          %s838 = scalar_lea.vmem [#allocation9], %s837
          %839 = dma.done %s835, 128
        $region64: #{tpu_custom_call.1} parent=59 // pred_fallthru
          _
      $region60: #{tpu_custom_call.1} parent=5 // pred_fallthru
        _
    $region6: #{tpu_custom_call.1} parent=1 // loop_footer
      %s21 = sadd.s32 1, %s17
    $region7: #{tpu_custom_call.1} parent=1 // loop_footer_branch
      %16 = sbr.rel target = $region3
    $region8: #{tpu_custom_call.1} parent=1 // loop_exit
      _
    %840 = vsyncpa [#allocation5], 1
    %s841 = scalar_lea.sflag [#allocation5], 1
    %842 = vsyncpa %s841, 1
    %843 = vsyncpa [#allocation8], 1
    %844 = vsyncpa [#allocation6], 1
    %s845 = scalar_lea.sflag [#allocation6], 1
    %846 = vsyncpa %s845, 1

</llo_original>
